<compile_context>
chip_gen: v5e
topology: v5e:2x2
jax: 0.10.0
libtpu: 0.0.40
codegen_flags: <defaults>
</compile_context>

<pallas_src>
import functools

import jax
import jax.numpy as jnp
from jax.experimental import pallas as pl
from jax.experimental.pallas import tpu as pltpu


def se_block_kernel(x_ref, w1t_ref, b1_ref, w2t_ref, b2_ref, o_ref, *,
                    channels_last):
    # channels_last=False: x block (Bn, C, HW)  -> gate broadcasts over lanes.
    # channels_last=True : x block (Bn, HW, C)  -> gate broadcasts over sublanes.
    spatial_axis = 1 if channels_last else 2

    # --- squeeze: global average pool over the spatial axis -> (Bn, C) ---
    pooled = jnp.mean(x_ref[...], axis=spatial_axis)

    # --- excitation: 1x1 conv -> relu -> 1x1 conv -> sigmoid (row form) ---
    # Tiny matmuls; compute is negligible vs HBM streaming.  Row orientation
    # keeps everything in the layout produced by the reduce (no transposes).
    h = jnp.dot(pooled, w1t_ref[...],
                preferred_element_type=jnp.float32) + b1_ref[...]      # (Bn, Cr)
    h = jnp.maximum(h, 0.0)
    s = jnp.dot(h, w2t_ref[...],
                preferred_element_type=jnp.float32) + b2_ref[...]      # (Bn, C)
    s = jax.nn.sigmoid(s).astype(x_ref.dtype)

    # --- scale: one streamed, lane-dense store of the whole block ---
    if channels_last:
        o_ref[...] = x_ref[...] * s[:, None, :]
    else:
        o_ref[...] = x_ref[...] * s[:, :, None]


def _tpu_budget():
    """Per-generation (vmem_ceiling_bytes, multi_core) policy."""
    vmem_cap = 64 << 20                       # conservative fallback (v7x-sized)
    try:
        vmem_cap = int(pltpu.get_tpu_info().vmem_capacity_bytes)
    except Exception:
        pass
    # ~62% of physical VMEM, never above 64 MiB:
    #   v7x (64 MiB phys)  -> ~40 MiB ceiling
    #   v5e/v6e (128 MiB)  ->  64 MiB ceiling
    vmem_ceiling = min(vmem_cap * 5 // 8, 64 << 20)

    kind = ""
    try:
        kind = jax.devices()[0].device_kind.lower()
    except Exception:
        pass
    single_core = any(tag in kind for tag in
                      ("v5 lite", "v5e", "v5litepod", "v6 lite", "v6e"))
    return vmem_ceiling, (not single_core)


def _pick_batch_block(n, per_batch_bytes, block_cap_bytes, multi_core):
    """Largest divisor Bn of n whose block fits the VMEM-derived cap.

    On multi-TensorCore chips, keep the parallel grid length >= 2 (and prefer
    an even grid) as long as that does not shrink blocks below ~2 MiB.
    """
    divisors = [d for d in range(1, n + 1) if n % d == 0]
    fits = [d for d in divisors if d * per_batch_bytes <= block_cap_bytes] or [1]
    if not multi_core:
        return max(fits)

    par = [d for d in fits if n // d >= 2]
    if not par:
        return max(fits)
    best = max(par)
    even_big = [d for d in par
                if (n // d) % 2 == 0 and d * per_batch_bytes >= (2 << 20)]
    if even_big:
        return max(even_big)
    if best * per_batch_bytes < (2 << 20):
        even_any = [d for d in par if (n // d) % 2 == 0]
        if even_any:
            return max(even_any)
    return best


def se_block(x_nchw, w1, b1, w2, b2):
    """x_nchw: (N, C, H, W) f32; w1: (Cr, C); b1: (Cr,); w2: (C, Cr); b2: (C,)."""
    N, C, H, W = x_nchw.shape
    Cr = w1.shape[0]
    HW = H * W
    itemsize = x_nchw.dtype.itemsize

    # Lane-dense layout selection (output last dim should be a multiple of 128).
    channels_last = (HW % 128 != 0) and (C % 128 == 0)
    if channels_last:
        x_flat = jnp.transpose(x_nchw.reshape(N, C, HW), (0, 2, 1))   # (N, HW, C)
        blk_tail = (HW, C)
    else:
        x_flat = x_nchw.reshape(N, C, HW)                              # free reshape
        blk_tail = (C, HW)

    # Row-oriented weights / biases (free XLA-side transposes of tiny arrays).
    w1t = jnp.transpose(w1)            # (C, Cr)
    w2t = jnp.transpose(w2)            # (Cr, C)
    b1r = b1.reshape(1, Cr)
    b2r = b2.reshape(1, C)

    per_batch_bytes = C * HW * itemsize
    weight_bytes = (2 * C * Cr + C + Cr) * 4
    headroom = 2 << 20

    vmem_ceiling, multi_core = _tpu_budget()
    # Double-buffered in + out blocks: 4 * block + weights + headroom <= ceiling.
    block_cap_bytes = max(per_batch_bytes,
                          (vmem_ceiling - 2 * weight_bytes - headroom) // 4)
    bn = _pick_batch_block(N, per_batch_bytes, block_cap_bytes, multi_core)
    grid = (N // bn,)

    block_bytes = bn * per_batch_bytes
    vmem_need = 4 * block_bytes + 2 * weight_bytes + headroom
    # Never declare a limit below the double-buffered working set.
    # TODO(synk): two-pass (pool pass + scale pass) split when a single batch
    # slab alone exceeds the per-generation ceiling.
    vmem_limit = int(max(vmem_need, min(32 << 20, vmem_ceiling)))

    cost = pl.CostEstimate(
        flops=2 * N * C * HW + 4 * N * C * Cr,
        transcendentals=N * C,
        bytes_accessed=2 * N * C * HW * itemsize + weight_bytes,
    )

    kernel = functools.partial(se_block_kernel, channels_last=channels_last)

    out_flat = pl.pallas_call(
        kernel,
        out_shape=jax.ShapeDtypeStruct(x_flat.shape, x_flat.dtype),
        grid_spec=pltpu.PrefetchScalarGridSpec(
            num_scalar_prefetch=0,
            grid=grid,
            in_specs=[
                pl.BlockSpec((bn,) + blk_tail, lambda n: (n, 0, 0)),  # x block
                pl.BlockSpec((C, Cr), lambda n: (0, 0)),              # W1^T
                pl.BlockSpec((1, Cr), lambda n: (0, 0)),              # b1 row
                pl.BlockSpec((Cr, C), lambda n: (0, 0)),              # W2^T
                pl.BlockSpec((1, C), lambda n: (0, 0)),               # b2 row
            ],
            out_specs=pl.BlockSpec((bn,) + blk_tail, lambda n: (n, 0, 0)),
        ),
        compiler_params=pltpu.CompilerParams(
            dimension_semantics=("parallel",),
            vmem_limit_bytes=vmem_limit,
        ),
        cost_estimate=cost,
    )(x_flat, w1t, b1r, w2t, b2r)

    if channels_last:
        return jnp.transpose(out_flat, (0, 2, 1)).reshape(N, C, H, W)
    return out_flat.reshape(N, C, H, W)


def reference_se_block(x, w1, b1, w2, b2):
    """Pure-JAX reference mirroring the PyTorch forward."""
    pooled = jnp.mean(x, axis=(2, 3), keepdims=True)                 # (N, C, 1, 1)
    h = jnp.einsum('ncij,oc->noij', pooled, w1) + b1[None, :, None, None]
    h = jnp.maximum(h, 0.0)
    s = jnp.einsum('ncij,oc->noij', h, w2) + b2[None, :, None, None]
    s = jax.nn.sigmoid(s)
    return s * x


def _make_params(key, c, r):
    cr = c // r
    k1, k2, k3, k4 = jax.random.split(key, 4)
    w1 = jax.random.normal(k1, (cr, c), dtype=jnp.float32) * 0.1   # fc[0].weight[:, :, 0, 0]
    b1 = jax.random.normal(k2, (cr,), dtype=jnp.float32) * 0.1     # fc[0].bias
    w2 = jax.random.normal(k3, (c, cr), dtype=jnp.float32) * 0.1   # fc[2].weight[:, :, 0, 0]
    b2 = jax.random.normal(k4, (c,), dtype=jnp.float32) * 0.1      # fc[2].bias
    return w1, b1, w2, b2


if __name__ == "__main__":
    key = jax.random.PRNGKey(0)
    kx1, kp1, kx2, kp2 = jax.random.split(key, 4)

    # --- main check: SE_Block(in_feats=32, r=16), HW=256 (lane-dense as-is) ---
    N, C, H, W = 2, 32, 16, 16
    x = jax.random.normal(kx1, (N, C, H, W), dtype=jnp.float32)
    w1, b1, w2, b2 = _make_params(kp1, C, r=16)

    out = jax.block_until_ready(se_block(x, w1, b1, w2, b2))
    ref = reference_se_block(x, w1, b1, w2, b2)
    assert out.shape == (N, C, H, W)
    assert jnp.allclose(out, ref, atol=1e-5, rtol=1e-5), "mismatch vs reference"

    # --- channels-last path: HW=49 (not a multiple of 128), C=128 ---
    N2, C2, H2, W2 = 2, 128, 7, 7
    x2 = jax.random.normal(kx2, (N2, C2, H2, W2), dtype=jnp.float32)
    w1b, b1b, w2b, b2b = _make_params(kp2, C2, r=16)

    out2 = jax.block_until_ready(se_block(x2, w1b, b1b, w2b, b2b))
    ref2 = reference_se_block(x2, w1b, b1b, w2b, b2b)
    assert out2.shape == (N2, C2, H2, W2)
    assert jnp.allclose(out2, ref2, atol=1e-5, rtol=1e-5), "mismatch vs reference (NHWC path)"

    print("KERNEL_OK")
</pallas_src>

<mosaic_0001>
module attributes {stable_mosaic.version = 11 : i64} {
  func.func @se_block_kernel(%arg0: i32, %arg1: memref<1x32x256xf32, #tpu.memory_space<vmem>>, %arg2: memref<32x2xf32, #tpu.memory_space<vmem>>, %arg3: memref<1x2xf32, #tpu.memory_space<vmem>>, %arg4: memref<2x32xf32, #tpu.memory_space<vmem>>, %arg5: memref<1x32xf32, #tpu.memory_space<vmem>>, %arg6: memref<1x32x256xf32, #tpu.memory_space<vmem>>) attributes {dimension_semantics = [#tpu.dimension_semantics<parallel>], iteration_bounds = array<i64: 2>, scalar_prefetch = 0 : i64, scratch_operands = 0 : i64, tpu.core_type = #tpu.core_type<tc>, window_params = [{transform_indices = @transform_0, window_bounds = array<i64: 1, 32, 256>}, {pipeline_mode = #tpu.pipeline_mode<synchronous>, transform_indices = @transform_1, window_bounds = array<i64: 32, 2>}, {pipeline_mode = #tpu.pipeline_mode<synchronous>, transform_indices = @transform_2, window_bounds = array<i64: 1, 2>}, {pipeline_mode = #tpu.pipeline_mode<synchronous>, transform_indices = @transform_3, window_bounds = array<i64: 2, 32>}, {pipeline_mode = #tpu.pipeline_mode<synchronous>, transform_indices = @transform_4, window_bounds = array<i64: 1, 32>}, {transform_indices = @transform_5, window_bounds = array<i64: 1, 32, 256>}]} {
    %c0 = arith.constant 0 : index
    %c0_0 = arith.constant 0 : index
    %c0_1 = arith.constant 0 : index
    %0 = vector.load %arg1[%c0, %c0_0, %c0_1] : memref<1x32x256xf32, #tpu.memory_space<vmem>>, vector<1x32x256xf32>
    %cst = arith.constant dense<0.000000e+00> : vector<1x32xf32>
    %1 = vector.multi_reduction <add>, %0, %cst [2] : vector<1x32x256xf32> to vector<1x32xf32>
    %cst_2 = arith.constant 2.560000e+02 : f32
    %2 = vector.broadcast %cst_2 : f32 to vector<1x32xf32>
    %3 = arith.divf %1, %2 : vector<1x32xf32>
    %c0_3 = arith.constant 0 : index
    %c0_4 = arith.constant 0 : index
    %4 = vector.load %arg2[%c0_3, %c0_4] : memref<32x2xf32, #tpu.memory_space<vmem>>, vector<32x2xf32>
    %cst_5 = arith.constant dense<0.000000e+00> : vector<1x2xf32>
    %5 = tpu.matmul %3, %4, %cst_5 {dimension_numbers = #tpu.dot_dimension_numbers<[1], [0], [0], [1], [0, 0, 1, 1], [], []>} : vector<1x32xf32>, vector<32x2xf32>, vector<1x2xf32> -> vector<1x2xf32>
    %c0_6 = arith.constant 0 : index
    %c0_7 = arith.constant 0 : index
    %6 = vector.load %arg3[%c0_6, %c0_7] : memref<1x2xf32, #tpu.memory_space<vmem>>, vector<1x2xf32>
    %7 = arith.addf %5, %6 : vector<1x2xf32>
    %cst_8 = arith.constant 0.000000e+00 : f32
    %8 = vector.broadcast %cst_8 : f32 to vector<1x2xf32>
    %9 = arith.maximumf %7, %8 : vector<1x2xf32>
    %c0_9 = arith.constant 0 : index
    %c0_10 = arith.constant 0 : index
    %10 = vector.load %arg4[%c0_9, %c0_10] : memref<2x32xf32, #tpu.memory_space<vmem>>, vector<2x32xf32>
    %cst_11 = arith.constant dense<0.000000e+00> : vector<1x32xf32>
    %11 = tpu.matmul %9, %10, %cst_11 {dimension_numbers = #tpu.dot_dimension_numbers<[1], [0], [0], [1], [0, 0, 1, 1], [], []>} : vector<1x2xf32>, vector<2x32xf32>, vector<1x32xf32> -> vector<1x32xf32>
    %c0_12 = arith.constant 0 : index
    %c0_13 = arith.constant 0 : index
    %12 = vector.load %arg5[%c0_12, %c0_13] : memref<1x32xf32, #tpu.memory_space<vmem>>, vector<1x32xf32>
    %13 = arith.addf %11, %12 : vector<1x32xf32>
    %14 = arith.negf %13 : vector<1x32xf32>
    %15 = math.exp %14 : vector<1x32xf32>
    %cst_14 = arith.constant 1.000000e+00 : f32
    %16 = vector.broadcast %cst_14 : f32 to vector<1x32xf32>
    %17 = arith.addf %16, %15 : vector<1x32xf32>
    %18 = arith.divf %16, %17 : vector<1x32xf32>
    %c0_15 = arith.constant 0 : index
    %c0_16 = arith.constant 0 : index
    %c0_17 = arith.constant 0 : index
    %19 = vector.load %arg1[%c0_15, %c0_16, %c0_17] : memref<1x32x256xf32, #tpu.memory_space<vmem>>, vector<1x32x256xf32>
    %20 = vector.shape_cast %18 : vector<1x32xf32> to vector<1x32x1xf32>
    %21 = vector.broadcast %20 : vector<1x32x1xf32> to vector<1x32x256xf32>
    %22 = arith.mulf %19, %21 : vector<1x32x256xf32>
    %c0_18 = arith.constant 0 : index
    %c0_19 = arith.constant 0 : index
    %c0_20 = arith.constant 0 : index
    %23 = vector.load %arg6[%c0_18, %c0_19, %c0_20] : memref<1x32x256xf32, #tpu.memory_space<vmem>>, vector<1x32x256xf32>
    tpu.vector_store %arg6[%c0_18, %c0_19, %c0_20], %22 {strides = array<i32>} : memref<1x32x256xf32, #tpu.memory_space<vmem>>, vector<1x32x256xf32>,
    return
  }
  func.func @transform_0(%arg0: i32) -> (i32, i32, i32) {
    %c0_i32 = arith.constant 0 : i32
    %c0_i32_0 = arith.constant 0 : i32
    %c0_i32_1 = arith.constant 0 : i32
    return %arg0, %c0_i32, %c0_i32_0 : i32, i32, i32
  }
  func.func @transform_1(%arg0: i32) -> (i32, i32) {
    %c0_i32 = arith.constant 0 : i32
    %c0_i32_0 = arith.constant 0 : i32
    %c0_i32_1 = arith.constant 0 : i32
    return %c0_i32, %c0_i32_0 : i32, i32
  }
  func.func @transform_2(%arg0: i32) -> (i32, i32) {
    %c0_i32 = arith.constant 0 : i32
    %c0_i32_0 = arith.constant 0 : i32
    %c0_i32_1 = arith.constant 0 : i32
    return %c0_i32, %c0_i32_0 : i32, i32
  }
  func.func @transform_3(%arg0: i32) -> (i32, i32) {
    %c0_i32 = arith.constant 0 : i32
    %c0_i32_0 = arith.constant 0 : i32
    %c0_i32_1 = arith.constant 0 : i32
    return %c0_i32, %c0_i32_0 : i32, i32
  }
  func.func @transform_4(%arg0: i32) -> (i32, i32) {
    %c0_i32 = arith.constant 0 : i32
    %c0_i32_0 = arith.constant 0 : i32
    %c0_i32_1 = arith.constant 0 : i32
    return %c0_i32, %c0_i32_0 : i32, i32
  }
  func.func @transform_5(%arg0: i32) -> (i32, i32, i32) {
    %c0_i32 = arith.constant 0 : i32
    %c0_i32_0 = arith.constant 0 : i32
    %c0_i32_1 = arith.constant 0 : i32
    return %arg0, %c0_i32, %c0_i32_0 : i32, i32, i32
  }
}

</mosaic_0001>

<llo_original>
// kernel: tpu_custom_call.1
$region0: #{tpu_custom_call.1}
  #allocation0 [shape = 'u32[]', space=smem, size = 0x4, offset = 0x4, fixed_abs, tag = 'smem constant byte address 0x4 - core index']
  #allocation1 [shape = 'u32[72,128]{1,0:T(1,128)}', space=vmem, size = 0x9000, scoped, tag = 'internal scratch']
  %s0 = inlined_call_operand.hbm [shape: f32[2,32,256], index: 0, kind: input, shape index: {}]
  %s1 = inlined_call_operand.vmem [shape: f32[32,2], index: 1, kind: input, shape index: {}]
  %s2 = inlined_call_operand.vmem [shape: f32[1,2], index: 2, kind: input, shape index: {}]
  %s3 = inlined_call_operand.vmem [shape: f32[2,32], index: 3, kind: input, shape index: {}]
  %s4 = inlined_call_operand.vmem [shape: f32[1,32], index: 4, kind: input, shape index: {}]
  %s5 = inlined_call_operand.hbm [shape: f32[2,32,256], index: 5, kind: output, shape index: {}]
  %s6 = sld [smem:[#allocation0]]
  $region57: #{tpu_custom_call.1} parent=0
    _
  %s8 = ssub.s32 1, %s6
  %s9 = scalar_select 0, %s8, %s6
  $region1: #{tpu_custom_call.1} parent=0
    #allocation2 [shape = 'u8[65536]{0}', space=vmem, size = 0x10000, scoped, tag = 'input window, operand 0']
    #allocation3 [shape = 's32[2]{0}', space=sflag, size = 0x8, scoped, tag = 'scoped memory for tpu_custom_call.1']
    #allocation4 [shape = 's32[2]{0}', space=sflag, size = 0x8, scoped, tag = 'scoped memory for tpu_custom_call.1']
    #allocation5 [shape = 'u8[65536]{0}', space=vmem, size = 0x10000, scoped, tag = 'output window, operand 0']
    %10 = vsyncpa [#allocation3], 0
    %s11 = scalar_lea.sflag [#allocation3], 1
    %12 = vsyncpa %s11, 0
    %13 = vsyncpa [#allocation4], 0
    %s14 = scalar_lea.sflag [#allocation4], 1
    %15 = vsyncpa %s14, 0
    loop: start=0, step=1, limit=4
    $region2: #{tpu_custom_call.1} parent=1 // loop_pre_header
      _
    $region3: #{tpu_custom_call.1} parent=1 // loop_header
      %s17 = sphi 0, %s21
      %p18 = scmp.ge.s32.totalorder %s17, 4
      %s27 = sphi 0, %s29
      %s30 = sphi 0, %s27
      %s31 = sphi 0, %s30
      %s47 = sphi 0, %s31
      %s51 = sphi 0, %s51
      %s53 = sphi 0, %s51
      %s54 = sphi 0, %s53
      %s68 = sphi 0, %s54
      %s72 = sphi 0, %s72
      %s74 = sphi 0, %s72
      %s75 = sphi 0, %s74
      %s89 = sphi 0, %s75
      %s93 = sphi 0, %s93
      %s95 = sphi 0, %s93
      %s96 = sphi 0, %s95
      %s110 = sphi 0, %s96
      %s114 = sphi 0, %s114
      %s116 = sphi 0, %s114
      %s117 = sphi 0, %s116
      %s131 = sphi 0, %s117
      %s137 = sphi 0, %s139
      %s140 = sphi 0, %s137
      %s141 = sphi 0, %s140
      %s157 = sphi 0, %s141
    $region4: #{tpu_custom_call.1} parent=1 // loop_header_branch
      %20 = sbr.rel (%p18) target = $region8
    $region5: #{tpu_custom_call.1} parent=1 // loop_body
      %s22 = ssub.s32 %s17, 1
      %s23 = ssub.s32 %s17, 2
      %s24 = sadd.s32 %s17, 1
      %s25 = ssub.s32 %s17, %s24
      %p26 = scmp.eq.s32.totalorder %s25, 0
      %s28 = sadd.s32 %s27, 1
      %s29 = scalar_select %p26, %s27, %s28
      %p32 = pneg %p26
      %p33 = scmp.eq.s32.totalorder %s17, 1
      %p34 = por %p32, %p33
      %p35 = scmp.ne.s32.totalorder %s27, %s30
      %p36 = scmp.eq.s32.totalorder %s17, 0
      %p37 = por %p35, %p36
      %p38 = scmp.ne.s32.totalorder %s27, %s30
      %p39 = scmp.eq.s32.totalorder %s22, 1
      %p40 = por %p38, %p39
      %p41 = scmp.ne.s32.totalorder %s30, %s31
      %p42 = scmp.eq.s32.totalorder %s22, 0
      %p43 = por %p41, %p42
      %p44 = scmp.ne.s32.totalorder %s30, %s31
      %p45 = scmp.eq.s32.totalorder %s23, 1
      %p46 = por %p44, %p45
      %p48 = scmp.ne.s32.totalorder %s31, %s47
      %p49 = scmp.eq.s32.totalorder %s23, 0
      %p50 = por %p48, %p49
      %s52 = sadd.s32 %s51, 1
      %p55 = scmp.eq.s32.totalorder %s17, 1
      %p56 = scmp.ne.s32.totalorder %s51, %s53
      %p57 = scmp.eq.s32.totalorder %s17, 0
      %p58 = por %p56, %p57
      %p59 = scmp.ne.s32.totalorder %s51, %s53
      %p60 = scmp.eq.s32.totalorder %s22, 1
      %p61 = por %p59, %p60
      %p62 = scmp.ne.s32.totalorder %s53, %s54
      %p63 = scmp.eq.s32.totalorder %s22, 0
      %p64 = por %p62, %p63
      %p65 = scmp.ne.s32.totalorder %s53, %s54
      %p66 = scmp.eq.s32.totalorder %s23, 1
      %p67 = por %p65, %p66
      %p69 = scmp.ne.s32.totalorder %s54, %s68
      %p70 = scmp.eq.s32.totalorder %s23, 0
      %p71 = por %p69, %p70
      %s73 = sadd.s32 %s72, 1
      %p76 = scmp.eq.s32.totalorder %s17, 1
      %p77 = scmp.ne.s32.totalorder %s72, %s74
      %p78 = scmp.eq.s32.totalorder %s17, 0
      %p79 = por %p77, %p78
      %p80 = scmp.ne.s32.totalorder %s72, %s74
      %p81 = scmp.eq.s32.totalorder %s22, 1
      %p82 = por %p80, %p81
      %p83 = scmp.ne.s32.totalorder %s74, %s75
      %p84 = scmp.eq.s32.totalorder %s22, 0
      %p85 = por %p83, %p84
      %p86 = scmp.ne.s32.totalorder %s74, %s75
      %p87 = scmp.eq.s32.totalorder %s23, 1
      %p88 = por %p86, %p87
      %p90 = scmp.ne.s32.totalorder %s75, %s89
      %p91 = scmp.eq.s32.totalorder %s23, 0
      %p92 = por %p90, %p91
      %s94 = sadd.s32 %s93, 1
      %p97 = scmp.eq.s32.totalorder %s17, 1
      %p98 = scmp.ne.s32.totalorder %s93, %s95
      %p99 = scmp.eq.s32.totalorder %s17, 0
      %p100 = por %p98, %p99
      %p101 = scmp.ne.s32.totalorder %s93, %s95
      %p102 = scmp.eq.s32.totalorder %s22, 1
      %p103 = por %p101, %p102
      %p104 = scmp.ne.s32.totalorder %s95, %s96
      %p105 = scmp.eq.s32.totalorder %s22, 0
      %p106 = por %p104, %p105
      %p107 = scmp.ne.s32.totalorder %s95, %s96
      %p108 = scmp.eq.s32.totalorder %s23, 1
      %p109 = por %p107, %p108
      %p111 = scmp.ne.s32.totalorder %s96, %s110
      %p112 = scmp.eq.s32.totalorder %s23, 0
      %p113 = por %p111, %p112
      %s115 = sadd.s32 %s114, 1
      %p118 = scmp.eq.s32.totalorder %s17, 1
      %p119 = scmp.ne.s32.totalorder %s114, %s116
      %p120 = scmp.eq.s32.totalorder %s17, 0
      %p121 = por %p119, %p120
      %p122 = scmp.ne.s32.totalorder %s114, %s116
      %p123 = scmp.eq.s32.totalorder %s22, 1
      %p124 = por %p122, %p123
      %p125 = scmp.ne.s32.totalorder %s116, %s117
      %p126 = scmp.eq.s32.totalorder %s22, 0
      %p127 = por %p125, %p126
      %p128 = scmp.ne.s32.totalorder %s116, %s117
      %p129 = scmp.eq.s32.totalorder %s23, 1
      %p130 = por %p128, %p129
      %p132 = scmp.ne.s32.totalorder %s117, %s131
      %p133 = scmp.eq.s32.totalorder %s23, 0
      %p134 = por %p132, %p133
      %s135 = ssub.s32 %s17, %s24
      %p136 = scmp.eq.s32.totalorder %s135, 0
      %s138 = sadd.s32 %s137, 1
      %s139 = scalar_select %p136, %s137, %s138
      %p142 = pneg %p136
      %p143 = scmp.eq.s32.totalorder %s17, 1
      %p144 = por %p142, %p143
      %p145 = scmp.ne.s32.totalorder %s137, %s140
      %p146 = scmp.eq.s32.totalorder %s17, 0
      %p147 = por %p145, %p146
      %p148 = scmp.ne.s32.totalorder %s137, %s140
      %p149 = scmp.eq.s32.totalorder %s22, 1
      %p150 = por %p148, %p149
      %p151 = scmp.ne.s32.totalorder %s140, %s141
      %p152 = scmp.eq.s32.totalorder %s22, 0
      %p153 = por %p151, %p152
      %p154 = scmp.ne.s32.totalorder %s140, %s141
      %p155 = scmp.eq.s32.totalorder %s23, 1
      %p156 = por %p154, %p155
      %p158 = scmp.ne.s32.totalorder %s141, %s157
      %p159 = scmp.eq.s32.totalorder %s23, 0
      %p160 = por %p158, %p159
      %p161 = scmp.le.s32.totalorder 1, %s17
      %p162 = scmp.lt.s32.totalorder %s17, 3
      %p163 = pnand %p161, %p162
      %p164 = pneg %p163
      // Predicated region
      $region9: #{tpu_custom_call.1} parent=5 // pred_check
        _
      $region10: #{tpu_custom_call.1} parent=5 // pred_check_branch
        %166 = sbr.rel (%p163) target = $region12
      $region11: #{tpu_custom_call.1} parent=5 // pred_region
        %s167 = ssub.s32 %s17, 1
        // Predicated region
        $region13: #{tpu_custom_call.1} parent=11 // pred_check
          %p168 = pneg %p64
        $region14: #{tpu_custom_call.1} parent=11 // pred_check_branch
          %170 = sbr.rel (%p168) target = $region16
        $region15: #{tpu_custom_call.1} parent=11 // pred_region
          _
        $region16: #{tpu_custom_call.1} parent=11 // pred_fallthru
          _
        // Predicated region
        $region17: #{tpu_custom_call.1} parent=11 // pred_check
          %p171 = pneg %p85
        $region18: #{tpu_custom_call.1} parent=11 // pred_check_branch
          %173 = sbr.rel (%p171) target = $region20
        $region19: #{tpu_custom_call.1} parent=11 // pred_region
          _
        $region20: #{tpu_custom_call.1} parent=11 // pred_fallthru
          _
        // Predicated region
        $region21: #{tpu_custom_call.1} parent=11 // pred_check
          %p174 = pneg %p106
        $region22: #{tpu_custom_call.1} parent=11 // pred_check_branch
          %176 = sbr.rel (%p174) target = $region24
        $region23: #{tpu_custom_call.1} parent=11 // pred_region
          _
        $region24: #{tpu_custom_call.1} parent=11 // pred_fallthru
          _
        // Predicated region
        $region25: #{tpu_custom_call.1} parent=11 // pred_check
          %p177 = pneg %p127
        $region26: #{tpu_custom_call.1} parent=11 // pred_check_branch
          %179 = sbr.rel (%p177) target = $region28
        $region27: #{tpu_custom_call.1} parent=11 // pred_region
          _
        $region28: #{tpu_custom_call.1} parent=11 // pred_fallthru
          _
      $region12: #{tpu_custom_call.1} parent=5 // pred_fallthru
        _
      %p180 = scmp.lt.s32.totalorder %s17, 2
      // Predicated region
      $region29: #{tpu_custom_call.1} parent=5 // pred_check
        %p181 = pneg %p180
      $region30: #{tpu_custom_call.1} parent=5 // pred_check_branch
        %183 = sbr.rel (%p181) target = $region32
      $region31: #{tpu_custom_call.1} parent=5 // pred_region
        // Predicated region
        $region33: #{tpu_custom_call.1} parent=31 // pred_check
          %p184 = pneg %p37
        $region34: #{tpu_custom_call.1} parent=31 // pred_check_branch
          %186 = sbr.rel (%p184) target = $region36
        $region35: #{tpu_custom_call.1} parent=31 // pred_region
          %s187 = sand.u32 %s27, 1
          %s188 = scalar_lea.sflag [#allocation3], %s187
          %s189 = sand.u32 %s27, 1
          %s190 = smul.addr %s189, 64
          %s191 = scalar_lea.vmem [#allocation2], %s190
          %193 = vsyncadd %s188, 0
          %s194 = smul.addr %s17, 8
          %s195 = smul.addr %s194, 8
          %s196 = scalar_lea.hbm %s0, %s195
          %s197 = sshll.u32 %s196, 4
          %s198 = int_to_ptr.hbm [resolvable:$true] %s197
          %s199 = sshll.u32 %s191, 4
          %s200 = int_to_ptr.vmem [resolvable:$true] %s199
          %205 = dma.hbm_to_vmem [thread:$0]  %s198, 1024, %s200, %s188, 256, 256, 16
        $region36: #{tpu_custom_call.1} parent=31 // pred_fallthru
          _
      $region32: #{tpu_custom_call.1} parent=5 // pred_fallthru
        _
      %p206 = scmp.le.s32.totalorder 1, %s17
      %p207 = scmp.lt.s32.totalorder %s17, 3
      %p208 = pnand %p206, %p207
      %p209 = pneg %p208
      // Predicated region
      $region37: #{tpu_custom_call.1} parent=5 // pred_check
        _
      $region38: #{tpu_custom_call.1} parent=5 // pred_check_branch
        %211 = sbr.rel (%p208) target = $region40
      $region39: #{tpu_custom_call.1} parent=5 // pred_region
        %s212 = ssub.s32 %s17, 1
        %s213 = sand.u32 %s30, 1
        %s214 = scalar_lea.sflag [#allocation3], %s213
        %s215 = sand.u32 %s30, 1
        %s216 = smul.addr %s215, 64
        %s217 = scalar_lea.vmem [#allocation2], %s216
        // Predicated region
        $region41: #{tpu_custom_call.1} parent=39 // pred_check
          %p218 = pneg %p43
        $region42: #{tpu_custom_call.1} parent=39 // pred_check_branch
          %220 = sbr.rel (%p218) target = $region44
        $region43: #{tpu_custom_call.1} parent=39 // pred_region
          %222 = dma.done %s214, 1024
        $region44: #{tpu_custom_call.1} parent=39 // pred_fallthru
          _
        %s223 = sand.u32 %s30, 1
        %s224 = scalar_lea.sflag [#allocation3], %s223
        %s225 = sand.u32 %s30, 1
        %s226 = smul.addr %s225, 64
        %s227 = scalar_lea.vmem [#allocation2], %s226
        %p228 = pneg %p43
        %p229 = pneg %p40
        %p230 = pneg %p64
        %p231 = pneg %p61
        %p232 = pneg %p85
        %p233 = pneg %p82
        %p234 = pneg %p106
        %p235 = pneg %p103
        %p236 = pneg %p127
        %p237 = pneg %p124
        %p238 = pneg %p153
        %p239 = pneg %p150
        %s240 = sand.u32 %s140, 1
        %s241 = scalar_lea.sflag [#allocation4], %s240
        %s242 = sand.u32 %s140, 1
        %s243 = smul.addr %s242, 64
        %s244 = scalar_lea.vmem [#allocation5], %s243
        %v245 = vld [vmem:[%s217] sm:$0xff]
        %v246 = vld [vmem:[%s217 + $0x8] sm:$0xff]
        %v247 = vld [vmem:[%s217 + $0x10] sm:$0xff]
        %v248 = vld [vmem:[%s217 + $0x18] sm:$0xff]
        %v249 = vld [vmem:[%s217 + $0x20] sm:$0xff]
        %v250 = vld [vmem:[%s217 + $0x28] sm:$0xff]
        %v251 = vld [vmem:[%s217 + $0x30] sm:$0xff]
        %v252 = vld [vmem:[%s217 + $0x38] sm:$0xff]
        %v253 = vadd.f32 %v245, %v246
        %254 = vadd.xlane.f32.xlu0 %v253
        %v255 = vpop.xlane.xlu0 %254
        %v256 = vadd.f32 %v247, %v248
        %257 = vadd.xlane.f32.xlu0 %v256
        %v258 = vpop.xlane.xlu0 %257
        %v259 = vadd.f32 %v249, %v250
        %260 = vadd.xlane.f32.xlu0 %v259
        %v261 = vpop.xlane.xlu0 %260
        %v262 = vadd.f32 %v251, %v252
        %263 = vadd.xlane.f32.xlu0 %v262
        %v264 = vpop.xlane.xlu0 %263
        %v265 = vrcp.pop 256.0
        %v266 = vmul.f32 256.0, %v265
        %v267 = vsub.f32 1.0, %v266
        %v268 = vmul.f32 %v265, %v267
        %v269 = vadd.f32 %v265, %v268
        %vm270 = vweird.f32 %v265
        %v271 = vsel %vm270, %v265, %v269
        %v272 = vmul.f32 %v255, %v271
        %v273 = vmul.f32 %v258, %v271
        %v274 = vmul.f32 %v261, %v271
        %v275 = vmul.f32 %v264, %v271
        %v276 = vld [vmem:[%s1] sm:$0xff]
        %v277 = vld [vmem:[%s1 + $0x8] sm:$0xff]
        %v278 = vld [vmem:[%s1 + $0x10] sm:$0xff]
        %v279 = vld [vmem:[%s1 + $0x18] sm:$0xff]
        %v280 = vld [vmem:[%s2] sm:$0x1]
        %v285 = vlaneseq
        %v286 = vand.u32 %v285, 127
        %v287 = vperm.slane %v272, %v286
        %v288 = vadd.s32 %v286, 4294967288
        %v289 = vperm.slane %v273, %v288
        %vm290 = vcmask 130112
        %v291 = vsel %vm290, %v289, %v287
        %v292 = vadd.s32 %v286, 4294967280
        %v293 = vperm.slane %v274, %v292
        %vm294 = vcmask 195712
        %v295 = vsel %vm294, %v293, %v291
        %v296 = vadd.s32 %v286, 4294967272
        %v297 = vperm.slane %v275, %v296
        %vm298 = vcmask 261312
        %v299 = vsel %vm298, %v297, %v295
        %vm300 = vcmask 261120
        %v301 = vsel %vm300, %v299, 0
        %303 = vmatpush.msra.mxu0 0.0
        %304 = vmatpush.msra.mxu0 0.0
        %305 = vmatpush.msra.mxu0 0.0
        %306 = vmatpush.msra.mxu0 0.0
        %307 = vmatpush.msra.mxu0 0.0
        %308 = vmatpush.msra.mxu0 0.0
        %309 = vmatpush.msra.mxu0 0.0
        %310 = vmatpush.msra.mxu0 0.0
        %311 = vmatpush.msra.mxu0 0.0
        %312 = vmatpush.msra.mxu0 0.0
        %313 = vmatpush.msra.mxu0 0.0
        %314 = vmatpush.msra.mxu0 0.0
        %315 = vmatpush.msra.mxu0 %v279
        %316 = vmatpush.msra.mxu0 %v278
        %317 = vmatpush.msra.mxu0 %v277
        %318 = vmatpush.msra.mxu0 %v276
        %319 = vmatmul.f32.gmra.mxu0 %v301
        %v320 = vpop.f32.mrf.mxu0
        %v321 = vadd.f32 %v280, %v320
        %322 = vdwg.mxu0
        %v323 = vmax.f32 %v321, 0.0
        %v324 = vld [vmem:[%s3] sm:$0x3]
        %v325 = vld [vmem:[%s4] sm:$0x1]
        %vm326 = vcmask 15360
        %v328 = vsel %vm326, %v323, 0
        %vm330 = vcmask 1041408
        %v332 = vsel %vm330, %v324, 0
        %334 = vmatpush.msra.mxu0 0.0
        %335 = vmatpush.msra.mxu0 0.0
        %336 = vmatpush.msra.mxu0 0.0
        %337 = vmatpush.msra.mxu0 0.0
        %338 = vmatpush.msra.mxu0 0.0
        %339 = vmatpush.msra.mxu0 0.0
        %340 = vmatpush.msra.mxu0 0.0
        %341 = vmatpush.msra.mxu0 0.0
        %342 = vmatpush.msra.mxu0 0.0
        %343 = vmatpush.msra.mxu0 0.0
        %344 = vmatpush.msra.mxu0 0.0
        %345 = vmatpush.msra.mxu0 0.0
        %346 = vmatpush.msra.mxu0 0.0
        %347 = vmatpush.msra.mxu0 0.0
        %348 = vmatpush.msra.mxu0 0.0
        %349 = vmatpush.msra.mxu0 %v332
        %350 = vmatmul.f32.gmra.mxu0 %v328
        %v351 = vpop.f32.mrf.mxu0
        %v352 = vadd.f32 %v325, %v351
        %353 = vdwg.mxu0
        %v354 = vxor.u32 %v352, 2147483648
        %v355 = vmul.f32 %v354, 1.442695
        %v356 = vpow.pop %v355
        %v357 = vadd.f32 %v356, 1.0
        %v358 = vrcp.pop %v357
        %v359 = vmul.f32 %v357, %v358
        %v360 = vsub.f32 1.0, %v359
        %v361 = vmul.f32 %v358, %v360
        %v362 = vadd.f32 %v358, %v361
        %vm363 = vweird.f32 %v357
        %vm364 = vweird.f32 %v358
        %vm365 = vmor %vm363, %vm364
        %v366 = vsel %vm365, %v358, %v362
        %v367 = vand.u32 2147483647, %v357
        %vm368 = vcmp.eq.f32.partialorder %v367, 8.507059e+37
        %v369 = vand.u32 %v357, 2147483648
        %v370 = vor.u32 1.1754944e-38, %v369
        %v371 = vsel %vm368, %v370, %v366
        %v372 = vmul.f32 1.0, %v371
        %v373 = vperm.slane %v372, 0
        %v374 = vlaneseq
        %v375 = vshrl.u32 %v374, 7
        %377 = vset.pattern.permute.xlu0 %v375
        %378 = vperm.xlu0 %377, %v373
        %v379 = vpop.permute.xlu0 %378
        %v380 = vlaneseq
        %v381 = vshrl.u32 %v380, 7
        %v382 = vadd.s32 %v381, 8
        %383 = vset.pattern.permute.xlu0 %v382
        %384 = vperm.xlu0 %383, %v373
        %v385 = vpop.permute.xlu0 %384
        %v386 = vlaneseq
        %v387 = vshrl.u32 %v386, 7
        %v388 = vadd.s32 %v387, 16
        %389 = vset.pattern.permute.xlu0 %v388
        %390 = vperm.xlu0 %389, %v373
        %v391 = vpop.permute.xlu0 %390
        %v392 = vlaneseq
        %v393 = vshrl.u32 %v392, 7
        %v394 = vadd.s32 %v393, 24
        %395 = vset.pattern.permute.xlu0 %v394
        %396 = vperm.xlu0 %395, %v373
        %v397 = vpop.permute.xlu0 %396
        %v398 = vmul.f32 %v245, %v379
        %v399 = vmul.f32 %v246, %v379
        %v400 = vmul.f32 %v247, %v385
        %v401 = vmul.f32 %v248, %v385
        %v402 = vmul.f32 %v249, %v391
        %v403 = vmul.f32 %v250, %v391
        %v404 = vmul.f32 %v251, %v397
        %v405 = vmul.f32 %v252, %v397
        %406 = vst [vmem:[%s244] sm:$0xff] %v398
        %407 = vst [vmem:[%s244 + $0x8] sm:$0xff] %v399
        %408 = vst [vmem:[%s244 + $0x10] sm:$0xff] %v400
        %409 = vst [vmem:[%s244 + $0x18] sm:$0xff] %v401
        %410 = vst [vmem:[%s244 + $0x20] sm:$0xff] %v402
        %411 = vst [vmem:[%s244 + $0x28] sm:$0xff] %v403
        %412 = vst [vmem:[%s244 + $0x30] sm:$0xff] %v404
        %413 = vst [vmem:[%s244 + $0x38] sm:$0xff] %v405
        %s414 = sand.u32 %s140, 1
        %s415 = scalar_lea.sflag [#allocation4], %s414
        %s416 = sand.u32 %s140, 1
        %s417 = smul.addr %s416, 64
        %s418 = scalar_lea.vmem [#allocation5], %s417
        // Predicated region
        $region45: #{tpu_custom_call.1} parent=39 // pred_check
          %p419 = pneg %p150
        $region46: #{tpu_custom_call.1} parent=39 // pred_check_branch
          %421 = sbr.rel (%p419) target = $region48
        $region47: #{tpu_custom_call.1} parent=39 // pred_region
          %423 = vsyncadd %s415, 0
          %s424 = smul.addr %s22, 8
          %s425 = smul.addr %s424, 8
          %s426 = scalar_lea.hbm %s5, %s425
          %s427 = sshll.u32 %s418, 4
          %s428 = int_to_ptr.vmem [resolvable:$true] %s427
          %s429 = sshll.u32 %s426, 4
          %s430 = int_to_ptr.hbm [resolvable:$true] %s429
          %435 = dma.vmem_to_hbm [thread:$0]  %s428, 1024, %s430, %s415, 256, 256, 16
        $region48: #{tpu_custom_call.1} parent=39 // pred_fallthru
          _
      $region40: #{tpu_custom_call.1} parent=5 // pred_fallthru
        _
      %p436 = scmp.le.s32.totalorder 2, %s17
      // Predicated region
      $region49: #{tpu_custom_call.1} parent=5 // pred_check
        %p437 = pneg %p436
      $region50: #{tpu_custom_call.1} parent=5 // pred_check_branch
        %439 = sbr.rel (%p437) target = $region52
      $region51: #{tpu_custom_call.1} parent=5 // pred_region
        %s440 = ssub.s32 %s17, 2
        // Predicated region
        $region53: #{tpu_custom_call.1} parent=51 // pred_check
          %p441 = pneg %p156
        $region54: #{tpu_custom_call.1} parent=51 // pred_check_branch
          %443 = sbr.rel (%p441) target = $region56
        $region55: #{tpu_custom_call.1} parent=51 // pred_region
          %s444 = sand.u32 %s141, 1
          %s445 = scalar_lea.sflag [#allocation4], %s444
          %s446 = sand.u32 %s141, 1
          %s447 = smul.addr %s446, 64
          %s448 = scalar_lea.vmem [#allocation5], %s447
          %450 = dma.done %s445, 1024
        $region56: #{tpu_custom_call.1} parent=51 // pred_fallthru
          _
      $region52: #{tpu_custom_call.1} parent=5 // pred_fallthru
        _
    $region6: #{tpu_custom_call.1} parent=1 // loop_footer
      %s21 = sadd.s32 1, %s17
    $region7: #{tpu_custom_call.1} parent=1 // loop_footer_branch
      %16 = sbr.rel target = $region3
    $region8: #{tpu_custom_call.1} parent=1 // loop_exit
      _
    %451 = vsyncpa [#allocation3], 1
    %s452 = scalar_lea.sflag [#allocation3], 1
    %453 = vsyncpa %s452, 1
    %454 = vsyncpa [#allocation4], 1
    %s455 = scalar_lea.sflag [#allocation4], 1
    %456 = vsyncpa %s455, 1

</llo_original>
